<compile_context>
chip_gen: v6e
topology: v6e:2x2x1
jax: 0.10.0
libtpu: 0.0.40
codegen_flags: <defaults>
</compile_context>

<pallas_src>
import jax
import jax.numpy as jnp
from jax.experimental import pallas as pl
from jax.experimental.pallas import tpu as pltpu

K = 7            # spatial-attention kernel size
PAD = K // 2     # "same" padding


# ---------------------------------------------------------------------------
# Kernel
# ---------------------------------------------------------------------------
def cbam_kernel(x_ref, w1t_ref, w2t_ref, tsa_ref, o_ref):
    """One grid step processes Bt images.

    x_ref  : (Bt, C, HW)  lane-dense activation block (lanes = H*W)
    w1t_ref: (C,  Cr)     fc1 weight, transposed
    w2t_ref: (Cr, C)      fc2 weight, transposed
    tsa_ref: (2*HW, HW)   Toeplitz/im2col matrix of the 7x7 'same' conv
                          (rows: [avg-plane pixels ; max-plane pixels])
    o_ref  : (Bt, C, HW)
    """
    Bt, C, HW = x_ref.shape

    xf = x_ref[...].astype(jnp.float32)                       # (Bt, C, HW)

    # ---- Channel attention: global avg/max pool + shared 2-layer MLP -------
    # M-stack the two branches (2*Bt rows) instead of block-diagonal weights.
    avg_p = jnp.mean(xf, axis=2)                               # (Bt, C)
    max_p = jnp.max(xf, axis=2)                                # (Bt, C)
    pooled = jnp.concatenate([avg_p, max_p], axis=0)           # (2*Bt, C)

    h = jnp.maximum(
        jnp.dot(pooled, w1t_ref[...], preferred_element_type=jnp.float32), 0.0)
    o2 = jnp.dot(h, w2t_ref[...], preferred_element_type=jnp.float32)   # (2*Bt, C)
    ca_logits = o2[:Bt, :] + o2[Bt:, :]                        # (Bt, C)
    # exp runs on the EUP; the divide only touches Bt*C + Bt*HW elements.
    # TODO(synk): pl.reciprocal(..., approx=True) would also move the divide to
    #             the EUP at a small accuracy cost (needs a looser tolerance).
    ca = 1.0 / (1.0 + jnp.exp(-ca_logits))                     # (Bt, C)

    # Keep y live through the spatial stage -> the input block is read once.
    y = xf * ca[:, :, None]                                    # (Bt, C, HW)

    # ---- Spatial attention: channel mean/max -> 7x7 conv as ONE matmul -----
    avg_c = jnp.mean(y, axis=1)                                # (Bt, HW)
    max_c = jnp.max(y, axis=1)                                 # (Bt, HW)
    planes = jnp.concatenate([avg_c, max_c], axis=1)           # (Bt, 2*HW) lane concat
    sa_logits = jnp.dot(planes, tsa_ref[...],
                        preferred_element_type=jnp.float32)    # (Bt, HW) on the MXU
    sa = 1.0 / (1.0 + jnp.exp(-sa_logits))                     # (Bt, HW)

    o_ref[...] = (y * sa[:, None, :]).astype(o_ref.dtype)      # full-lane-width store


# ---------------------------------------------------------------------------
# Wrapper-side helpers
# ---------------------------------------------------------------------------
def _build_spatial_toeplitz(w_conv, H, W):
    """(1, 2, K, K) 'same'-padded conv weights -> (2*H*W, H*W) matrix T so that
    conv([avg; max]) == concat([avg.flat, max.flat], axis=-1) @ T."""
    _, _, kh, kw = w_conv.shape
    ph, pw = kh // 2, kw // 2
    HW = H * W
    oi, oj = jnp.meshgrid(jnp.arange(H), jnp.arange(W), indexing="ij")
    p = (oi * W + oj).reshape(-1)                              # output flat index
    T = jnp.zeros((2, HW, HW), jnp.float32)
    for ki in range(kh):
        for kj in range(kw):
            ii = oi + ki - ph
            jj = oj + kj - pw
            valid = ((ii >= 0) & (ii < H) & (jj >= 0) & (jj < W)).reshape(-1)
            q = (jnp.clip(ii, 0, H - 1) * W + jnp.clip(jj, 0, W - 1)).reshape(-1)
            for c in range(2):
                w = w_conv[0, c, ki, kj].astype(jnp.float32)
                T = T.at[c, q, p].add(jnp.where(valid, w, 0.0))
    return T.reshape(2 * HW, HW)


def _chip_has_two_tensorcores():
    try:
        kind = jax.devices()[0].device_kind.lower()
    except Exception:
        return False
    return "v7" in kind        # v7x: 2 TCs/chip; v5e/v6e: 1 TC/chip


def _vmem_capacity_bytes():
    try:
        return int(pltpu.get_tpu_info().vmem_capacity_bytes)
    except Exception:
        return 64 << 20        # v7x lower bound -> safe on every generation


def _pick_block_b(B, C, HW, weight_bytes):
    """Largest divisor of B that fits the VMEM budget; >= 2 grid steps on v7x."""
    budget = int(0.5 * min(_vmem_capacity_bytes(), 64 << 20)) - 2 * weight_bytes
    per_img = (2 * 2 + 3) * C * HW * 4     # in+out double-buffered + f32 temporaries
    cap = max(1, budget // per_img)
    min_steps = 2 if (_chip_has_two_tensorcores() and B >= 2) else 1
    divisors = [d for d in range(1, B + 1) if B % d == 0 and d <= cap]
    preferred = [d for d in divisors if B // d >= min_steps]
    pool = preferred if preferred else (divisors if divisors else [1])
    return max(pool)


def cbam_pallas(x, w1, w2, w_conv, *, block_b=None):
    """x: (B, C, H, W); w1: (C//r, C); w2: (C, C//r); w_conv: (1, 2, K, K)."""
    B, C, H, W = x.shape
    Cr = w1.shape[0]
    HW = H * W

    # Lane-dense activation layout (free reshape): lanes = H*W.
    xf = x.reshape(B, C, HW)
    w1t = w1.T.astype(jnp.float32)                             # (C, Cr)
    w2t = w2.T.astype(jnp.float32)                             # (Cr, C)
    # TODO(synk): the Toeplitz weight is O(HW^2); for large feature maps a
    #             shift/roll-based conv path should be used instead.
    tsa = _build_spatial_toeplitz(w_conv, H, W)                # (2*HW, HW)

    weight_bytes = 4 * (w1t.size + w2t.size + tsa.size)
    if block_b is None:
        block_b = _pick_block_b(B, C, HW, weight_bytes)
    assert B % block_b == 0

    out = pl.pallas_call(
        cbam_kernel,
        out_shape=jax.ShapeDtypeStruct((B, C, HW), x.dtype),
        grid=(B // block_b,),
        in_specs=[
            pl.BlockSpec((block_b, C, HW), lambda b: (b, 0, 0)),
            pl.BlockSpec((C, Cr), lambda b: (0, 0)),
            pl.BlockSpec((Cr, C), lambda b: (0, 0)),
            pl.BlockSpec((2 * HW, HW), lambda b: (0, 0)),
        ],
        out_specs=pl.BlockSpec((block_b, C, HW), lambda b: (b, 0, 0)),
        compiler_params=pltpu.CompilerParams(
            dimension_semantics=("parallel",),
            vmem_limit_bytes=32 * 1024 * 1024,
        ),
    )(xf, w1t, w2t, tsa)
    return out.reshape(B, C, H, W)


# ---------------------------------------------------------------------------
# Pure-JAX reference (matches the PyTorch forward)
# ---------------------------------------------------------------------------
def cbam_ref(x, w1, w2, w_conv):
    avg = jnp.mean(x, axis=(2, 3))
    mx = jnp.max(x, axis=(2, 3))

    def mlp(p):
        h = jax.nn.relu(jnp.einsum("rc,bc->br", w1, p))
        return jnp.einsum("cr,br->bc", w2, h)

    ca = jax.nn.sigmoid(mlp(avg) + mlp(mx))[:, :, None, None]
    y = ca * x

    feat = jnp.concatenate(
        [jnp.mean(y, axis=1, keepdims=True), jnp.max(y, axis=1, keepdims=True)],
        axis=1,
    )
    conv = jax.lax.conv_general_dilated(
        feat, w_conv, window_strides=(1, 1),
        padding=((PAD, PAD), (PAD, PAD)),
        dimension_numbers=("NCHW", "OIHW", "NCHW"),
    )
    sa = jax.nn.sigmoid(conv)
    return sa * y


if __name__ == "__main__":
    B, C, H, W = 8, 16, 16, 16
    ratio = 8
    Cr = C // ratio

    key = jax.random.PRNGKey(0)
    kx, k1, k2, k3 = jax.random.split(key, 4)

    x = jax.random.normal(kx, (B, C, H, W), dtype=jnp.float32)
    # Deterministic synthetic parameters (shapes from the module __init__).
    w1 = 0.3 * jax.random.normal(k1, (Cr, C), dtype=jnp.float32)            # fc1
    w2 = 0.3 * jax.random.normal(k2, (C, Cr), dtype=jnp.float32)            # fc2
    w_conv = 0.1 * jax.random.normal(k3, (1, 2, K, K), dtype=jnp.float32)   # 7x7 conv

    out = jax.block_until_ready(cbam_pallas(x, w1, w2, w_conv))
    ref = jax.block_until_ready(cbam_ref(x, w1, w2, w_conv))

    assert out.shape == x.shape and out.dtype == x.dtype
    err = float(jnp.max(jnp.abs(out - ref)))
    assert jnp.allclose(out, ref, rtol=2e-3, atol=2e-3), f"max abs err = {err}"
    print("KERNEL_OK")
</pallas_src>

<mosaic_0001>
module attributes {stable_mosaic.version = 11 : i64} {
  func.func @cbam_kernel(%arg0: i32, %arg1: memref<8x16x256xf32, #tpu.memory_space<vmem>>, %arg2: memref<16x2xf32, #tpu.memory_space<vmem>>, %arg3: memref<2x16xf32, #tpu.memory_space<vmem>>, %arg4: memref<512x256xf32, #tpu.memory_space<vmem>>, %arg5: memref<8x16x256xf32, #tpu.memory_space<vmem>>) attributes {dimension_semantics = [#tpu.dimension_semantics<parallel>], iteration_bounds = array<i64: 1>, scalar_prefetch = 0 : i64, scratch_operands = 0 : i64, tpu.core_type = #tpu.core_type<tc>, window_params = [{transform_indices = @transform_0, window_bounds = array<i64: 8, 16, 256>}, {pipeline_mode = #tpu.pipeline_mode<synchronous>, transform_indices = @transform_1, window_bounds = array<i64: 16, 2>}, {pipeline_mode = #tpu.pipeline_mode<synchronous>, transform_indices = @transform_2, window_bounds = array<i64: 2, 16>}, {pipeline_mode = #tpu.pipeline_mode<synchronous>, transform_indices = @transform_3, window_bounds = array<i64: 512, 256>}, {transform_indices = @transform_4, window_bounds = array<i64: 8, 16, 256>}]} {
    %c0 = arith.constant 0 : index
    %c0_0 = arith.constant 0 : index
    %c0_1 = arith.constant 0 : index
    %0 = vector.load %arg1[%c0, %c0_0, %c0_1] : memref<8x16x256xf32, #tpu.memory_space<vmem>>, vector<8x16x256xf32>
    %cst = arith.constant dense<0.000000e+00> : vector<8x16xf32>
    %1 = vector.multi_reduction <add>, %0, %cst [2] : vector<8x16x256xf32> to vector<8x16xf32>
    %cst_2 = arith.constant 2.560000e+02 : f32
    %2 = vector.broadcast %cst_2 : f32 to vector<8x16xf32>
    %3 = arith.divf %1, %2 : vector<8x16xf32>
    %cst_3 = arith.constant dense<0xFF800000> : vector<8x16xf32>
    %4 = vector.multi_reduction <maximumf>, %0, %cst_3 [2] : vector<8x16x256xf32> to vector<8x16xf32>
    %5 = tpu.concatenate %3, %4 in 0 : vector<8x16xf32>, vector<8x16xf32> -> vector<16x16xf32>
    %c0_4 = arith.constant 0 : index
    %c0_5 = arith.constant 0 : index
    %6 = vector.load %arg2[%c0_4, %c0_5] : memref<16x2xf32, #tpu.memory_space<vmem>>, vector<16x2xf32>
    %cst_6 = arith.constant dense<0.000000e+00> : vector<16x2xf32>
    %7 = tpu.matmul %5, %6, %cst_6 {dimension_numbers = #tpu.dot_dimension_numbers<[1], [0], [0], [1], [0, 0, 1, 1], [], []>} : vector<16x16xf32>, vector<16x2xf32>, vector<16x2xf32> -> vector<16x2xf32>
    %cst_7 = arith.constant 0.000000e+00 : f32
    %8 = vector.broadcast %cst_7 : f32 to vector<16x2xf32>
    %9 = arith.maximumf %7, %8 : vector<16x2xf32>
    %c0_8 = arith.constant 0 : index
    %c0_9 = arith.constant 0 : index
    %10 = vector.load %arg3[%c0_8, %c0_9] : memref<2x16xf32, #tpu.memory_space<vmem>>, vector<2x16xf32>
    %cst_10 = arith.constant dense<0.000000e+00> : vector<16x16xf32>
    %11 = tpu.matmul %9, %10, %cst_10 {dimension_numbers = #tpu.dot_dimension_numbers<[1], [0], [0], [1], [0, 0, 1, 1], [], []>} : vector<16x2xf32>, vector<2x16xf32>, vector<16x16xf32> -> vector<16x16xf32>
    %12 = vector.extract_strided_slice %11 {offsets = [0, 0], sizes = [8, 16], strides = [1, 1]} : vector<16x16xf32> to vector<8x16xf32>
    %13 = vector.extract_strided_slice %11 {offsets = [8, 0], sizes = [8, 16], strides = [1, 1]} : vector<16x16xf32> to vector<8x16xf32>
    %14 = arith.addf %12, %13 : vector<8x16xf32>
    %cst_11 = arith.constant 0.000000e+00 : f32
    %15 = vector.broadcast %cst_11 : f32 to vector<8x16xf32>
    %16 = arith.subf %15, %14 : vector<8x16xf32>
    %17 = math.exp %16 : vector<8x16xf32>
    %cst_12 = arith.constant 1.000000e+00 : f32
    %18 = vector.broadcast %cst_12 : f32 to vector<8x16xf32>
    %19 = arith.addf %18, %17 : vector<8x16xf32>
    %cst_13 = arith.constant 1.000000e+00 : f32
    %20 = vector.broadcast %cst_13 : f32 to vector<8x16xf32>
    %21 = arith.divf %20, %19 : vector<8x16xf32>
    %22 = vector.shape_cast %21 : vector<8x16xf32> to vector<8x16x1xf32>
    %23 = vector.broadcast %22 : vector<8x16x1xf32> to vector<8x16x256xf32>
    %24 = arith.mulf %0, %23 : vector<8x16x256xf32>
    %cst_14 = arith.constant dense<0.000000e+00> : vector<8x256xf32>
    %25 = vector.multi_reduction <add>, %24, %cst_14 [1] : vector<8x16x256xf32> to vector<8x256xf32>
    %cst_15 = arith.constant 1.600000e+01 : f32
    %26 = vector.broadcast %cst_15 : f32 to vector<8x256xf32>
    %27 = arith.divf %25, %26 : vector<8x256xf32>
    %cst_16 = arith.constant dense<0xFF800000> : vector<8x256xf32>
    %28 = vector.multi_reduction <maximumf>, %24, %cst_16 [1] : vector<8x16x256xf32> to vector<8x256xf32>
    %29 = tpu.concatenate %27, %28 in 1 : vector<8x256xf32>, vector<8x256xf32> -> vector<8x512xf32>
    %c0_17 = arith.constant 0 : index
    %c0_18 = arith.constant 0 : index
    %30 = vector.load %arg4[%c0_17, %c0_18] : memref<512x256xf32, #tpu.memory_space<vmem>>, vector<512x256xf32>
    %cst_19 = arith.constant dense<0.000000e+00> : vector<8x256xf32>
    %31 = tpu.matmul %29, %30, %cst_19 {dimension_numbers = #tpu.dot_dimension_numbers<[1], [0], [0], [1], [0, 0, 1, 1], [], []>} : vector<8x512xf32>, vector<512x256xf32>, vector<8x256xf32> -> vector<8x256xf32>
    %cst_20 = arith.constant 0.000000e+00 : f32
    %32 = vector.broadcast %cst_20 : f32 to vector<8x256xf32>
    %33 = arith.subf %32, %31 : vector<8x256xf32>
    %34 = math.exp %33 : vector<8x256xf32>
    %cst_21 = arith.constant 1.000000e+00 : f32
    %35 = vector.broadcast %cst_21 : f32 to vector<8x256xf32>
    %36 = arith.addf %35, %34 : vector<8x256xf32>
    %cst_22 = arith.constant 1.000000e+00 : f32
    %37 = vector.broadcast %cst_22 : f32 to vector<8x256xf32>
    %38 = arith.divf %37, %36 : vector<8x256xf32>
    %39 = vector.shape_cast %38 : vector<8x256xf32> to vector<8x1x256xf32>
    %40 = vector.broadcast %39 : vector<8x1x256xf32> to vector<8x16x256xf32>
    %41 = arith.mulf %24, %40 : vector<8x16x256xf32>
    %c0_23 = arith.constant 0 : index
    %c0_24 = arith.constant 0 : index
    %c0_25 = arith.constant 0 : index
    %42 = vector.load %arg5[%c0_23, %c0_24, %c0_25] : memref<8x16x256xf32, #tpu.memory_space<vmem>>, vector<8x16x256xf32>
    tpu.vector_store %arg5[%c0_23, %c0_24, %c0_25], %41 {strides = array<i32>} : memref<8x16x256xf32, #tpu.memory_space<vmem>>, vector<8x16x256xf32>,
    return
  }
  func.func @transform_0(%arg0: i32) -> (i32, i32, i32) {
    %c0_i32 = arith.constant 0 : i32
    %c0_i32_0 = arith.constant 0 : i32
    %c0_i32_1 = arith.constant 0 : i32
    return %arg0, %c0_i32, %c0_i32_0 : i32, i32, i32
  }
  func.func @transform_1(%arg0: i32) -> (i32, i32) {
    %c0_i32 = arith.constant 0 : i32
    %c0_i32_0 = arith.constant 0 : i32
    %c0_i32_1 = arith.constant 0 : i32
    return %c0_i32, %c0_i32_0 : i32, i32
  }
  func.func @transform_2(%arg0: i32) -> (i32, i32) {
    %c0_i32 = arith.constant 0 : i32
    %c0_i32_0 = arith.constant 0 : i32
    %c0_i32_1 = arith.constant 0 : i32
    return %c0_i32, %c0_i32_0 : i32, i32
  }
  func.func @transform_3(%arg0: i32) -> (i32, i32) {
    %c0_i32 = arith.constant 0 : i32
    %c0_i32_0 = arith.constant 0 : i32
    %c0_i32_1 = arith.constant 0 : i32
    return %c0_i32, %c0_i32_0 : i32, i32
  }
  func.func @transform_4(%arg0: i32) -> (i32, i32, i32) {
    %c0_i32 = arith.constant 0 : i32
    %c0_i32_0 = arith.constant 0 : i32
    %c0_i32_1 = arith.constant 0 : i32
    return %arg0, %c0_i32, %c0_i32_0 : i32, i32, i32
  }
}

</mosaic_0001>

<llo_original>
// kernel: tpu_custom_call.1
$region0: #{tpu_custom_call.1}
  #allocation0 [shape = 'u32[]', space=smem, size = 0x4, offset = 0x4, fixed_abs, tag = 'smem constant byte address 0x4 - core index']
  #allocation1 [shape = 'u32[144,128]{1,0:T(1,128)}', space=vmem, size = 0x12000, scoped, tag = 'internal scratch']
  %s0 = inlined_call_operand.hbm [shape: f32[8,16,256], index: 0, kind: input, shape index: {}]
  %s1 = inlined_call_operand.vmem [shape: f32[16,2], index: 1, kind: input, shape index: {}]
  %s2 = inlined_call_operand.vmem [shape: f32[2,16], index: 2, kind: input, shape index: {}]
  %s3 = inlined_call_operand.hbm [shape: f32[512,256], index: 3, kind: input, shape index: {}]
  %s4 = inlined_call_operand.hbm [shape: f32[8,16,256], index: 4, kind: output, shape index: {}]
  %s5 = sld [smem:[#allocation0]]
  $region34: #{tpu_custom_call.1} parent=0
    _
  %s7 = ssub.s32 1, %s5
  %s8 = scalar_select 0, %s7, %s5
  $region1: #{tpu_custom_call.1} parent=0
    #allocation2 [shape = 'u8[131072]{0}', space=vmem, size = 0x20000, scoped, tag = 'input window, operand 0, single buffered']
    #allocation3 [shape = 's32[1]{0}', space=sflag, size = 0x4, scoped, tag = 'scoped memory for tpu_custom_call.1']
    #allocation4 [shape = 's32[1]{0}', space=sflag, size = 0x4, scoped, tag = 'scoped memory for tpu_custom_call.1']
    #allocation5 [shape = 'u8[524288]{0}', space=vmem, size = 0x80000, scoped, tag = 'input window, operand 3, single buffered']
    #allocation6 [shape = 's32[1]{0}', space=sflag, size = 0x4, scoped, tag = 'scoped memory for tpu_custom_call.1']
    #allocation7 [shape = 'u8[131072]{0}', space=vmem, size = 0x20000, scoped, tag = 'output window, operand 0, single buffered']
    %9 = vsyncpa [#allocation3], 0
    %10 = vsyncpa [#allocation6], 0
    %11 = vsyncpa [#allocation4], 0
    // Predicated region
    $region2: #{tpu_custom_call.1} parent=1 // pred_check
      _
    $region3: #{tpu_custom_call.1} parent=1 // pred_check_branch
      %13 = sbr.rel (0) target = $region5
    $region4: #{tpu_custom_call.1} parent=1 // pred_region
      %s15 = ssub.s32 4096, 4096
      %16 = vsyncadd [#allocation3], %s15
      %s17 = sshll.u32 [#allocation2], 4
      %s18 = int_to_ptr.vmem [resolvable:$true] %s17
      %23 = dma.hbm_to_vmem [thread:$0]  %s0, 4096, %s18, [#allocation3], 256, 256, 16
    $region5: #{tpu_custom_call.1} parent=1 // pred_fallthru
      _
    // Predicated region
    $region6: #{tpu_custom_call.1} parent=1 // pred_check
      _
    $region7: #{tpu_custom_call.1} parent=1 // pred_check_branch
      %25 = sbr.rel (0) target = $region9
    $region8: #{tpu_custom_call.1} parent=1 // pred_region
      _
    $region9: #{tpu_custom_call.1} parent=1 // pred_fallthru
      _
    // Predicated region
    $region10: #{tpu_custom_call.1} parent=1 // pred_check
      _
    $region11: #{tpu_custom_call.1} parent=1 // pred_check_branch
      %27 = sbr.rel (0) target = $region13
    $region12: #{tpu_custom_call.1} parent=1 // pred_region
      _
    $region13: #{tpu_custom_call.1} parent=1 // pred_fallthru
      _
    // Predicated region
    $region14: #{tpu_custom_call.1} parent=1 // pred_check
      _
    $region15: #{tpu_custom_call.1} parent=1 // pred_check_branch
      %29 = sbr.rel (0) target = $region17
    $region16: #{tpu_custom_call.1} parent=1 // pred_region
      %s31 = ssub.s32 16384, 16384
      %32 = vsyncadd [#allocation6], %s31
      %s33 = sshll.u32 [#allocation5], 4
      %s34 = int_to_ptr.vmem [resolvable:$true] %s33
      %39 = dma.hbm_to_vmem [thread:$0]  %s3, 16384, %s34, [#allocation6], 256, 256, 16
    $region17: #{tpu_custom_call.1} parent=1 // pred_fallthru
      _
    // Predicated region
    $region18: #{tpu_custom_call.1} parent=1 // pred_check
      _
    $region19: #{tpu_custom_call.1} parent=1 // pred_check_branch
      %41 = sbr.rel (0) target = $region21
    $region20: #{tpu_custom_call.1} parent=1 // pred_region
      %42 = dma.done [#allocation3], 4096
    $region21: #{tpu_custom_call.1} parent=1 // pred_fallthru
      _
    // Predicated region
    $region22: #{tpu_custom_call.1} parent=1 // pred_check
      _
    $region23: #{tpu_custom_call.1} parent=1 // pred_check_branch
      %44 = sbr.rel (0) target = $region25
    $region24: #{tpu_custom_call.1} parent=1 // pred_region
      %45 = dma.done [#allocation6], 16384
    $region25: #{tpu_custom_call.1} parent=1 // pred_fallthru
      _
    %v46 = vld [vmem:[#allocation2] sm:$0xff]
    %v47 = vld [vmem:[#allocation2 + $0x8] sm:$0xff]
    %v48 = vld [vmem:[#allocation2 + $0x10] sm:$0xff]
    %v49 = vld [vmem:[#allocation2 + $0x18] sm:$0xff]
    %v50 = vld [vmem:[#allocation2 + $0x20] sm:$0xff]
    %v51 = vld [vmem:[#allocation2 + $0x28] sm:$0xff]
    %v52 = vld [vmem:[#allocation2 + $0x30] sm:$0xff]
    %v53 = vld [vmem:[#allocation2 + $0x38] sm:$0xff]
    %v54 = vld [vmem:[#allocation2 + $0x40] sm:$0xff]
    %v55 = vld [vmem:[#allocation2 + $0x48] sm:$0xff]
    %v56 = vld [vmem:[#allocation2 + $0x50] sm:$0xff]
    %v57 = vld [vmem:[#allocation2 + $0x58] sm:$0xff]
    %v58 = vld [vmem:[#allocation2 + $0x60] sm:$0xff]
    %v59 = vld [vmem:[#allocation2 + $0x68] sm:$0xff]
    %v60 = vld [vmem:[#allocation2 + $0x70] sm:$0xff]
    %v61 = vld [vmem:[#allocation2 + $0x78] sm:$0xff]
    %v62 = vld [vmem:[#allocation2 + $0x80] sm:$0xff]
    %v63 = vld [vmem:[#allocation2 + $0x88] sm:$0xff]
    %v64 = vld [vmem:[#allocation2 + $0x90] sm:$0xff]
    %v65 = vld [vmem:[#allocation2 + $0x98] sm:$0xff]
    %v66 = vld [vmem:[#allocation2 + $0xa0] sm:$0xff]
    %v67 = vld [vmem:[#allocation2 + $0xa8] sm:$0xff]
    %v68 = vld [vmem:[#allocation2 + $0xb0] sm:$0xff]
    %v69 = vld [vmem:[#allocation2 + $0xb8] sm:$0xff]
    %v70 = vld [vmem:[#allocation2 + $0xc0] sm:$0xff]
    %v71 = vld [vmem:[#allocation2 + $0xc8] sm:$0xff]
    %v72 = vld [vmem:[#allocation2 + $0xd0] sm:$0xff]
    %v73 = vld [vmem:[#allocation2 + $0xd8] sm:$0xff]
    %v74 = vld [vmem:[#allocation2 + $0xe0] sm:$0xff]
    %v75 = vld [vmem:[#allocation2 + $0xe8] sm:$0xff]
    %v76 = vld [vmem:[#allocation2 + $0xf0] sm:$0xff]
    %v77 = vld [vmem:[#allocation2 + $0xf8] sm:$0xff]
    %v78 = vadd.f32 %v46, %v47
    %79 = vadd.xlane.f32.xlu0 %v78
    %v80 = vpop.xlane.xlu0 %79
    %v81 = vadd.f32 %v48, %v49
    %82 = vadd.xlane.f32.xlu0 %v81
    %v83 = vpop.xlane.xlu0 %82
    %v84 = vadd.f32 %v50, %v51
    %85 = vadd.xlane.f32.xlu0 %v84
    %v86 = vpop.xlane.xlu0 %85
    %v87 = vadd.f32 %v52, %v53
    %88 = vadd.xlane.f32.xlu0 %v87
    %v89 = vpop.xlane.xlu0 %88
    %v90 = vadd.f32 %v54, %v55
    %91 = vadd.xlane.f32.xlu0 %v90
    %v92 = vpop.xlane.xlu0 %91
    %v93 = vadd.f32 %v56, %v57
    %94 = vadd.xlane.f32.xlu0 %v93
    %v95 = vpop.xlane.xlu0 %94
    %v96 = vadd.f32 %v58, %v59
    %97 = vadd.xlane.f32.xlu0 %v96
    %v98 = vpop.xlane.xlu0 %97
    %v99 = vadd.f32 %v60, %v61
    %100 = vadd.xlane.f32.xlu0 %v99
    %v101 = vpop.xlane.xlu0 %100
    %v102 = vadd.f32 %v62, %v63
    %103 = vadd.xlane.f32.xlu0 %v102
    %v104 = vpop.xlane.xlu0 %103
    %v105 = vadd.f32 %v64, %v65
    %106 = vadd.xlane.f32.xlu0 %v105
    %v107 = vpop.xlane.xlu0 %106
    %v108 = vadd.f32 %v66, %v67
    %109 = vadd.xlane.f32.xlu0 %v108
    %v110 = vpop.xlane.xlu0 %109
    %v111 = vadd.f32 %v68, %v69
    %112 = vadd.xlane.f32.xlu0 %v111
    %v113 = vpop.xlane.xlu0 %112
    %v114 = vadd.f32 %v70, %v71
    %115 = vadd.xlane.f32.xlu0 %v114
    %v116 = vpop.xlane.xlu0 %115
    %v117 = vadd.f32 %v72, %v73
    %118 = vadd.xlane.f32.xlu0 %v117
    %v119 = vpop.xlane.xlu0 %118
    %v120 = vadd.f32 %v74, %v75
    %121 = vadd.xlane.f32.xlu0 %v120
    %v122 = vpop.xlane.xlu0 %121
    %v123 = vadd.f32 %v76, %v77
    %124 = vadd.xlane.f32.xlu0 %v123
    %v125 = vpop.xlane.xlu0 %124
    %v126 = vrcp.pop 256.0
    %v127 = vmul.f32 %v80, %v126
    %v128 = vmul.f32 %v83, %v126
    %v129 = vmul.f32 %v86, %v126
    %v130 = vmul.f32 %v89, %v126
    %v131 = vmul.f32 %v92, %v126
    %v132 = vmul.f32 %v95, %v126
    %v133 = vmul.f32 %v98, %v126
    %v134 = vmul.f32 %v101, %v126
    %v135 = vmul.f32 %v104, %v126
    %v136 = vmul.f32 %v107, %v126
    %v137 = vmul.f32 %v110, %v126
    %v138 = vmul.f32 %v113, %v126
    %v139 = vmul.f32 %v116, %v126
    %v140 = vmul.f32 %v119, %v126
    %v141 = vmul.f32 %v122, %v126
    %v142 = vmul.f32 %v125, %v126
    %v143 = vmax.f32 %v46, %v47
    %144 = vmax.xlane.f32.xlu0 %v143
    %v145 = vpop.xlane.xlu0 %144
    %v146 = vmax.f32 %v48, %v49
    %147 = vmax.xlane.f32.xlu0 %v146
    %v148 = vpop.xlane.xlu0 %147
    %v149 = vmax.f32 %v50, %v51
    %150 = vmax.xlane.f32.xlu0 %v149
    %v151 = vpop.xlane.xlu0 %150
    %v152 = vmax.f32 %v52, %v53
    %153 = vmax.xlane.f32.xlu0 %v152
    %v154 = vpop.xlane.xlu0 %153
    %v155 = vmax.f32 %v54, %v55
    %156 = vmax.xlane.f32.xlu0 %v155
    %v157 = vpop.xlane.xlu0 %156
    %v158 = vmax.f32 %v56, %v57
    %159 = vmax.xlane.f32.xlu0 %v158
    %v160 = vpop.xlane.xlu0 %159
    %v161 = vmax.f32 %v58, %v59
    %162 = vmax.xlane.f32.xlu0 %v161
    %v163 = vpop.xlane.xlu0 %162
    %v164 = vmax.f32 %v60, %v61
    %165 = vmax.xlane.f32.xlu0 %v164
    %v166 = vpop.xlane.xlu0 %165
    %v167 = vmax.f32 %v62, %v63
    %168 = vmax.xlane.f32.xlu0 %v167
    %v169 = vpop.xlane.xlu0 %168
    %v170 = vmax.f32 %v64, %v65
    %171 = vmax.xlane.f32.xlu0 %v170
    %v172 = vpop.xlane.xlu0 %171
    %v173 = vmax.f32 %v66, %v67
    %174 = vmax.xlane.f32.xlu0 %v173
    %v175 = vpop.xlane.xlu0 %174
    %v176 = vmax.f32 %v68, %v69
    %177 = vmax.xlane.f32.xlu0 %v176
    %v178 = vpop.xlane.xlu0 %177
    %v179 = vmax.f32 %v70, %v71
    %180 = vmax.xlane.f32.xlu0 %v179
    %v181 = vpop.xlane.xlu0 %180
    %v182 = vmax.f32 %v72, %v73
    %183 = vmax.xlane.f32.xlu0 %v182
    %v184 = vpop.xlane.xlu0 %183
    %v185 = vmax.f32 %v74, %v75
    %186 = vmax.xlane.f32.xlu0 %v185
    %v187 = vpop.xlane.xlu0 %186
    %v188 = vmax.f32 %v76, %v77
    %189 = vmax.xlane.f32.xlu0 %v188
    %v190 = vpop.xlane.xlu0 %189
    %v207 = vlaneseq
    %v208 = vand.u32 %v207, 127
    %v209 = vlaneseq
    %v210 = vshrl.u32 %v209, 7
    %v211 = vsub.s32 %v208, %v210
    %v212 = vrot.slane %v127, %v211
    %v213 = vadd.s32 %v208, 4294967288
    %v214 = vlaneseq
    %v215 = vshrl.u32 %v214, 7
    %v216 = vsub.s32 %v213, %v215
    %v217 = vrot.slane %v128, %v216
    %vm218 = vcmask 130112
    %v219 = vsel %vm218, %v217, %v212
    %v220 = vlaneseq
    %v221 = vshrl.u32 %v220, 7
    %v222 = vsub.s32 %v208, %v221
    %v223 = vrot.slane %v129, %v222
    %v224 = vlaneseq
    %v225 = vshrl.u32 %v224, 7
    %v226 = vsub.s32 %v213, %v225
    %v227 = vrot.slane %v130, %v226
    %v228 = vsel %vm218, %v227, %v223
    %v229 = vlaneseq
    %v230 = vshrl.u32 %v229, 7
    %v231 = vsub.s32 %v208, %v230
    %v232 = vrot.slane %v131, %v231
    %v233 = vlaneseq
    %v234 = vshrl.u32 %v233, 7
    %v235 = vsub.s32 %v213, %v234
    %v236 = vrot.slane %v132, %v235
    %v237 = vsel %vm218, %v236, %v232
    %v238 = vlaneseq
    %v239 = vshrl.u32 %v238, 7
    %v240 = vsub.s32 %v208, %v239
    %v241 = vrot.slane %v133, %v240
    %v242 = vlaneseq
    %v243 = vshrl.u32 %v242, 7
    %v244 = vsub.s32 %v213, %v243
    %v245 = vrot.slane %v134, %v244
    %v246 = vsel %vm218, %v245, %v241
    %v247 = vlaneseq
    %v248 = vshrl.u32 %v247, 7
    %v249 = vsub.s32 %v208, %v248
    %v250 = vrot.slane %v135, %v249
    %v251 = vlaneseq
    %v252 = vshrl.u32 %v251, 7
    %v253 = vsub.s32 %v213, %v252
    %v254 = vrot.slane %v136, %v253
    %v255 = vsel %vm218, %v254, %v250
    %v256 = vlaneseq
    %v257 = vshrl.u32 %v256, 7
    %v258 = vsub.s32 %v208, %v257
    %v259 = vrot.slane %v137, %v258
    %v260 = vlaneseq
    %v261 = vshrl.u32 %v260, 7
    %v262 = vsub.s32 %v213, %v261
    %v263 = vrot.slane %v138, %v262
    %v264 = vsel %vm218, %v263, %v259
    %v265 = vlaneseq
    %v266 = vshrl.u32 %v265, 7
    %v267 = vsub.s32 %v208, %v266
    %v268 = vrot.slane %v139, %v267
    %v269 = vlaneseq
    %v270 = vshrl.u32 %v269, 7
    %v271 = vsub.s32 %v213, %v270
    %v272 = vrot.slane %v140, %v271
    %v273 = vsel %vm218, %v272, %v268
    %v274 = vlaneseq
    %v275 = vshrl.u32 %v274, 7
    %v276 = vsub.s32 %v208, %v275
    %v277 = vrot.slane %v141, %v276
    %v278 = vlaneseq
    %v279 = vshrl.u32 %v278, 7
    %v280 = vsub.s32 %v213, %v279
    %v281 = vrot.slane %v142, %v280
    %v282 = vsel %vm218, %v281, %v277
    %vm283 = vcmask 1041409
    %v284 = vsel %vm283, %v228, %v219
    %vm285 = vcmask 1042434
    %v286 = vsel %vm285, %v237, %v284
    %vm287 = vcmask 1043459
    %v288 = vsel %vm287, %v246, %v286
    %vm289 = vcmask 1044484
    %v290 = vsel %vm289, %v255, %v288
    %vm291 = vcmask 1045509
    %v292 = vsel %vm291, %v264, %v290
    %vm293 = vcmask 1046534
    %v294 = vsel %vm293, %v273, %v292
    %vm295 = vcmask 1047559
    %v296 = vsel %vm295, %v282, %v294
    %v313 = vlaneseq
    %v314 = vshrl.u32 %v313, 7
    %v315 = vsub.s32 %v208, %v314
    %v316 = vrot.slane %v145, %v315
    %v317 = vlaneseq
    %v318 = vshrl.u32 %v317, 7
    %v319 = vsub.s32 %v213, %v318
    %v320 = vrot.slane %v148, %v319
    %v321 = vsel %vm218, %v320, %v316
    %v322 = vlaneseq
    %v323 = vshrl.u32 %v322, 7
    %v324 = vsub.s32 %v208, %v323
    %v325 = vrot.slane %v151, %v324
    %v326 = vlaneseq
    %v327 = vshrl.u32 %v326, 7
    %v328 = vsub.s32 %v213, %v327
    %v329 = vrot.slane %v154, %v328
    %v330 = vsel %vm218, %v329, %v325
    %v331 = vlaneseq
    %v332 = vshrl.u32 %v331, 7
    %v333 = vsub.s32 %v208, %v332
    %v334 = vrot.slane %v157, %v333
    %v335 = vlaneseq
    %v336 = vshrl.u32 %v335, 7
    %v337 = vsub.s32 %v213, %v336
    %v338 = vrot.slane %v160, %v337
    %v339 = vsel %vm218, %v338, %v334
    %v340 = vlaneseq
    %v341 = vshrl.u32 %v340, 7
    %v342 = vsub.s32 %v208, %v341
    %v343 = vrot.slane %v163, %v342
    %v344 = vlaneseq
    %v345 = vshrl.u32 %v344, 7
    %v346 = vsub.s32 %v213, %v345
    %v347 = vrot.slane %v166, %v346
    %v348 = vsel %vm218, %v347, %v343
    %v349 = vlaneseq
    %v350 = vshrl.u32 %v349, 7
    %v351 = vsub.s32 %v208, %v350
    %v352 = vrot.slane %v169, %v351
    %v353 = vlaneseq
    %v354 = vshrl.u32 %v353, 7
    %v355 = vsub.s32 %v213, %v354
    %v356 = vrot.slane %v172, %v355
    %v357 = vsel %vm218, %v356, %v352
    %v358 = vlaneseq
    %v359 = vshrl.u32 %v358, 7
    %v360 = vsub.s32 %v208, %v359
    %v361 = vrot.slane %v175, %v360
    %v362 = vlaneseq
    %v363 = vshrl.u32 %v362, 7
    %v364 = vsub.s32 %v213, %v363
    %v365 = vrot.slane %v178, %v364
    %v366 = vsel %vm218, %v365, %v361
    %v367 = vlaneseq
    %v368 = vshrl.u32 %v367, 7
    %v369 = vsub.s32 %v208, %v368
    %v370 = vrot.slane %v181, %v369
    %v371 = vlaneseq
    %v372 = vshrl.u32 %v371, 7
    %v373 = vsub.s32 %v213, %v372
    %v374 = vrot.slane %v184, %v373
    %v375 = vsel %vm218, %v374, %v370
    %v376 = vlaneseq
    %v377 = vshrl.u32 %v376, 7
    %v378 = vsub.s32 %v208, %v377
    %v379 = vrot.slane %v187, %v378
    %v380 = vlaneseq
    %v381 = vshrl.u32 %v380, 7
    %v382 = vsub.s32 %v213, %v381
    %v383 = vrot.slane %v190, %v382
    %v384 = vsel %vm218, %v383, %v379
    %v385 = vsel %vm283, %v330, %v321
    %v386 = vsel %vm285, %v339, %v385
    %v387 = vsel %vm287, %v348, %v386
    %v388 = vsel %vm289, %v357, %v387
    %v389 = vsel %vm291, %v366, %v388
    %v390 = vsel %vm293, %v375, %v389
    %v391 = vsel %vm295, %v384, %v390
    %v392 = vld [vmem:[%s1] sm:$0xff]
    %v393 = vld [vmem:[%s1 + $0x8] sm:$0xff]
    %vm394 = vcmask 130048
    %v395 = vsel %vm394, %v296, 0
    %v397 = vsel %vm394, %v391, 0
    %399 = vmatprep.subr.mxu0 0.0
    %400 = vmatpush1.msra.mxu0 0.0
    %401 = vmatprep.subr.mxu0 0.0
    %402 = vmatpush1.msra.mxu0 0.0
    %403 = vmatprep.subr.mxu0 0.0
    %404 = vmatpush1.msra.mxu0 0.0
    %405 = vmatprep.subr.mxu0 0.0
    %406 = vmatpush1.msra.mxu0 0.0
    %407 = vmatprep.subr.mxu0 0.0
    %408 = vmatpush1.msra.mxu0 0.0
    %409 = vmatprep.subr.mxu0 0.0
    %410 = vmatpush1.msra.mxu0 0.0
    %411 = vmatprep.subr.mxu0 0.0
    %412 = vmatpush1.msra.mxu0 0.0
    %413 = vmatprep.subr.mxu0 0.0
    %414 = vmatpush1.msra.mxu0 0.0
    %415 = vmatprep.subr.mxu0 0.0
    %416 = vmatpush1.msra.mxu0 0.0
    %417 = vmatprep.subr.mxu0 0.0
    %418 = vmatpush1.msra.mxu0 0.0
    %419 = vmatprep.subr.mxu0 0.0
    %420 = vmatpush1.msra.mxu0 0.0
    %421 = vmatprep.subr.mxu0 0.0
    %422 = vmatpush1.msra.mxu0 0.0
    %423 = vmatprep.subr.mxu0 0.0
    %424 = vmatpush1.msra.mxu0 0.0
    %425 = vmatprep.subr.mxu0 0.0
    %426 = vmatpush1.msra.mxu0 0.0
    %427 = vmatprep.subr.mxu0 0.0
    %428 = vmatpush1.msra.mxu0 %v393
    %429 = vmatprep.subr.mxu0 0.0
    %430 = vmatpush1.msra.mxu0 %v392
    %431 = vmatprep.subr.mxu0 0.0
    %432 = vmatpush2.msra.mxu0 0.0
    %433 = vmatprep.subr.mxu0 0.0
    %434 = vmatpush2.msra.mxu0 0.0
    %435 = vmatprep.subr.mxu0 0.0
    %436 = vmatpush2.msra.mxu0 0.0
    %437 = vmatprep.subr.mxu0 0.0
    %438 = vmatpush2.msra.mxu0 0.0
    %439 = vmatprep.subr.mxu0 0.0
    %440 = vmatpush2.msra.mxu0 0.0
    %441 = vmatprep.subr.mxu0 0.0
    %442 = vmatpush2.msra.mxu0 0.0
    %443 = vmatprep.subr.mxu0 0.0
    %444 = vmatpush2.msra.mxu0 0.0
    %445 = vmatprep.subr.mxu0 0.0
    %446 = vmatpush2.msra.mxu0 0.0
    %447 = vmatprep.subr.mxu0 0.0
    %448 = vmatpush2.msra.mxu0 0.0
    %449 = vmatprep.subr.mxu0 0.0
    %450 = vmatpush2.msra.mxu0 0.0
    %451 = vmatprep.subr.mxu0 0.0
    %452 = vmatpush2.msra.mxu0 0.0
    %453 = vmatprep.subr.mxu0 0.0
    %454 = vmatpush2.msra.mxu0 0.0
    %455 = vmatprep.subr.mxu0 0.0
    %456 = vmatpush2.msra.mxu0 0.0
    %457 = vmatprep.subr.mxu0 0.0
    %458 = vmatpush2.msra.mxu0 0.0
    %459 = vmatprep.subr.mxu0 0.0
    %460 = vmatpush2.msra.mxu0 0.0
    %461 = vmatprep.subr.mxu0 0.0
    %462 = vmatpush2.msra.mxu0 0.0
    %463 = vmatprep.mubr.f32.mxu0 0.0
    %464 = vmatmul.mubr.f32.gmra.mxu0 %v395
    %v465 = vpop.f32.mrf.mxu0
    %v466 = vadd.f32 0.0, %v465
    %v467 = vpop.f32.mrf.mxu0
    %468 = vmatprep.mubr.f32.mxu0 0.0
    %469 = vmatmul.mubr.f32.gmra.mxu0 %v397
    %v470 = vpop.f32.mrf.mxu0
    %v471 = vadd.f32 0.0, %v470
    %v472 = vpop.f32.mrf.mxu0
    %473 = vdwg.mxu0
    %v474 = vmax.f32 %v466, 0.0
    %v475 = vmax.f32 %v471, 0.0
    %v476 = vld [vmem:[%s2] sm:$0x3]
    %vm477 = vcmask 15360
    %v479 = vsel %vm477, %v474, 0
    %v482 = vsel %vm477, %v475, 0
    %vm484 = vcmask 1041408
    %v486 = vsel %vm484, %v476, 0
    %488 = vmatprep.subr.mxu0 0.0
    %489 = vmatpush1.msra.mxu0 0.0
    %490 = vmatprep.subr.mxu0 0.0
    %491 = vmatpush1.msra.mxu0 0.0
    %492 = vmatprep.subr.mxu0 0.0
    %493 = vmatpush1.msra.mxu0 0.0
    %494 = vmatprep.subr.mxu0 0.0
    %495 = vmatpush1.msra.mxu0 0.0
    %496 = vmatprep.subr.mxu0 0.0
    %497 = vmatpush1.msra.mxu0 0.0
    %498 = vmatprep.subr.mxu0 0.0
    %499 = vmatpush1.msra.mxu0 0.0
    %500 = vmatprep.subr.mxu0 0.0
    %501 = vmatpush1.msra.mxu0 0.0
    %502 = vmatprep.subr.mxu0 0.0
    %503 = vmatpush1.msra.mxu0 0.0
    %504 = vmatprep.subr.mxu0 0.0
    %505 = vmatpush1.msra.mxu0 0.0
    %506 = vmatprep.subr.mxu0 0.0
    %507 = vmatpush1.msra.mxu0 0.0
    %508 = vmatprep.subr.mxu0 0.0
    %509 = vmatpush1.msra.mxu0 0.0
    %510 = vmatprep.subr.mxu0 0.0
    %511 = vmatpush1.msra.mxu0 0.0
    %512 = vmatprep.subr.mxu0 0.0
    %513 = vmatpush1.msra.mxu0 0.0
    %514 = vmatprep.subr.mxu0 0.0
    %515 = vmatpush1.msra.mxu0 0.0
    %516 = vmatprep.subr.mxu0 0.0
    %517 = vmatpush1.msra.mxu0 0.0
    %518 = vmatprep.subr.mxu0 0.0
    %519 = vmatpush1.msra.mxu0 %v486
    %520 = vmatprep.subr.mxu0 0.0
    %521 = vmatpush2.msra.mxu0 0.0
    %522 = vmatprep.subr.mxu0 0.0
    %523 = vmatpush2.msra.mxu0 0.0
    %524 = vmatprep.subr.mxu0 0.0
    %525 = vmatpush2.msra.mxu0 0.0
    %526 = vmatprep.subr.mxu0 0.0
    %527 = vmatpush2.msra.mxu0 0.0
    %528 = vmatprep.subr.mxu0 0.0
    %529 = vmatpush2.msra.mxu0 0.0
    %530 = vmatprep.subr.mxu0 0.0
    %531 = vmatpush2.msra.mxu0 0.0
    %532 = vmatprep.subr.mxu0 0.0
    %533 = vmatpush2.msra.mxu0 0.0
    %534 = vmatprep.subr.mxu0 0.0
    %535 = vmatpush2.msra.mxu0 0.0
    %536 = vmatprep.subr.mxu0 0.0
    %537 = vmatpush2.msra.mxu0 0.0
    %538 = vmatprep.subr.mxu0 0.0
    %539 = vmatpush2.msra.mxu0 0.0
    %540 = vmatprep.subr.mxu0 0.0
    %541 = vmatpush2.msra.mxu0 0.0
    %542 = vmatprep.subr.mxu0 0.0
    %543 = vmatpush2.msra.mxu0 0.0
    %544 = vmatprep.subr.mxu0 0.0
    %545 = vmatpush2.msra.mxu0 0.0
    %546 = vmatprep.subr.mxu0 0.0
    %547 = vmatpush2.msra.mxu0 0.0
    %548 = vmatprep.subr.mxu0 0.0
    %549 = vmatpush2.msra.mxu0 0.0
    %550 = vmatprep.subr.mxu0 0.0
    %551 = vmatpush2.msra.mxu0 0.0
    %552 = vmatprep.mubr.f32.mxu0 0.0
    %553 = vmatmul.mubr.f32.gmra.mxu0 %v479
    %v554 = vpop.f32.mrf.mxu0
    %v555 = vadd.f32 0.0, %v554
    %v556 = vpop.f32.mrf.mxu0
    %557 = vmatprep.mubr.f32.mxu0 0.0
    %558 = vmatmul.mubr.f32.gmra.mxu0 %v482
    %v559 = vpop.f32.mrf.mxu0
    %v560 = vadd.f32 0.0, %v559
    %v561 = vpop.f32.mrf.mxu0
    %562 = vdwg.mxu0
    %v563 = vadd.f32 %v555, %v560
    %v564 = vsub.f32 0.0, %v563
    %v565 = vmul.f32 %v564, 1.442695
    %v566 = vpow.pop %v565
    %v567 = vadd.f32 %v566, 1.0
    %v568 = vrcp.pop %v567
    %v569 = vmul.f32 1.0, %v568
    %v570 = vlaneseq
    %v571 = vshrl.u32 %v570, 7
    %v572 = vsub.s32 0, %v571
    %v573 = vrot.slane %v569, %v572
    %575 = vbcast.lane.b32.xlu0 %v573, 256
    %v576 = vpop.permute.xlu0 %575
    %s578 = sor.u32 256, 8
    %579 = vbcast.lane.b32.xlu0 %v573, %s578
    %v580 = vpop.permute.xlu0 %579
    %v581 = vlaneseq
    %v582 = vshrl.u32 %v581, 7
    %v583 = vsub.s32 1, %v582
    %v584 = vrot.slane %v569, %v583
    %586 = vbcast.lane.b32.xlu0 %v584, 256
    %v587 = vpop.permute.xlu0 %586
    %s589 = sor.u32 256, 8
    %590 = vbcast.lane.b32.xlu0 %v584, %s589
    %v591 = vpop.permute.xlu0 %590
    %v592 = vlaneseq
    %v593 = vshrl.u32 %v592, 7
    %v594 = vsub.s32 2, %v593
    %v595 = vrot.slane %v569, %v594
    %597 = vbcast.lane.b32.xlu0 %v595, 256
    %v598 = vpop.permute.xlu0 %597
    %s600 = sor.u32 256, 8
    %601 = vbcast.lane.b32.xlu0 %v595, %s600
    %v602 = vpop.permute.xlu0 %601
    %v603 = vlaneseq
    %v604 = vshrl.u32 %v603, 7
    %v605 = vsub.s32 3, %v604
    %v606 = vrot.slane %v569, %v605
    %608 = vbcast.lane.b32.xlu0 %v606, 256
    %v609 = vpop.permute.xlu0 %608
    %s611 = sor.u32 256, 8
    %612 = vbcast.lane.b32.xlu0 %v606, %s611
    %v613 = vpop.permute.xlu0 %612
    %v614 = vlaneseq
    %v615 = vshrl.u32 %v614, 7
    %v616 = vsub.s32 4, %v615
    %v617 = vrot.slane %v569, %v616
    %619 = vbcast.lane.b32.xlu0 %v617, 256
    %v620 = vpop.permute.xlu0 %619
    %s622 = sor.u32 256, 8
    %623 = vbcast.lane.b32.xlu0 %v617, %s622
    %v624 = vpop.permute.xlu0 %623
    %v625 = vlaneseq
    %v626 = vshrl.u32 %v625, 7
    %v627 = vsub.s32 5, %v626
    %v628 = vrot.slane %v569, %v627
    %630 = vbcast.lane.b32.xlu0 %v628, 256
    %v631 = vpop.permute.xlu0 %630
    %s633 = sor.u32 256, 8
    %634 = vbcast.lane.b32.xlu0 %v628, %s633
    %v635 = vpop.permute.xlu0 %634
    %v636 = vlaneseq
    %v637 = vshrl.u32 %v636, 7
    %v638 = vsub.s32 6, %v637
    %v639 = vrot.slane %v569, %v638
    %641 = vbcast.lane.b32.xlu0 %v639, 256
    %v642 = vpop.permute.xlu0 %641
    %s644 = sor.u32 256, 8
    %645 = vbcast.lane.b32.xlu0 %v639, %s644
    %v646 = vpop.permute.xlu0 %645
    %v647 = vlaneseq
    %v648 = vshrl.u32 %v647, 7
    %v649 = vsub.s32 7, %v648
    %v650 = vrot.slane %v569, %v649
    %652 = vbcast.lane.b32.xlu0 %v650, 256
    %v653 = vpop.permute.xlu0 %652
    %s655 = sor.u32 256, 8
    %656 = vbcast.lane.b32.xlu0 %v650, %s655
    %v657 = vpop.permute.xlu0 %656
    %v658 = vmul.f32 %v46, %v576
    %v659 = vmul.f32 %v47, %v576
    %v660 = vmul.f32 %v48, %v580
    %v661 = vmul.f32 %v49, %v580
    %v662 = vmul.f32 %v50, %v587
    %v663 = vmul.f32 %v51, %v587
    %v664 = vmul.f32 %v52, %v591
    %v665 = vmul.f32 %v53, %v591
    %v666 = vmul.f32 %v54, %v598
    %v667 = vmul.f32 %v55, %v598
    %v668 = vmul.f32 %v56, %v602
    %v669 = vmul.f32 %v57, %v602
    %v670 = vmul.f32 %v58, %v609
    %v671 = vmul.f32 %v59, %v609
    %v672 = vmul.f32 %v60, %v613
    %v673 = vmul.f32 %v61, %v613
    %v674 = vmul.f32 %v62, %v620
    %v675 = vmul.f32 %v63, %v620
    %v676 = vmul.f32 %v64, %v624
    %v677 = vmul.f32 %v65, %v624
    %v678 = vmul.f32 %v66, %v631
    %v679 = vmul.f32 %v67, %v631
    %v680 = vmul.f32 %v68, %v635
    %v681 = vmul.f32 %v69, %v635
    %v682 = vmul.f32 %v70, %v642
    %v683 = vmul.f32 %v71, %v642
    %v684 = vmul.f32 %v72, %v646
    %v685 = vmul.f32 %v73, %v646
    %v686 = vmul.f32 %v74, %v653
    %v687 = vmul.f32 %v75, %v653
    %v688 = vmul.f32 %v76, %v657
    %v689 = vmul.f32 %v77, %v657
    %v690 = vadd.f32 %v658, %v660
    %v691 = vrot.slane %v690, 4
    %v692 = vadd.f32 %v690, %v691
    %v693 = vrot.slane %v692, 2
    %v694 = vadd.f32 %v692, %v693
    %v695 = vrot.slane %v694, 1
    %v696 = vadd.f32 %v694, %v695
    %v697 = vadd.f32 %v659, %v661
    %v698 = vrot.slane %v697, 4
    %v699 = vadd.f32 %v697, %v698
    %v700 = vrot.slane %v699, 2
    %v701 = vadd.f32 %v699, %v700
    %v702 = vrot.slane %v701, 1
    %v703 = vadd.f32 %v701, %v702
    %v704 = vadd.f32 %v662, %v664
    %v705 = vrot.slane %v704, 4
    %v706 = vadd.f32 %v704, %v705
    %v707 = vrot.slane %v706, 2
    %v708 = vadd.f32 %v706, %v707
    %v709 = vrot.slane %v708, 1
    %v710 = vadd.f32 %v708, %v709
    %v711 = vadd.f32 %v663, %v665
    %v712 = vrot.slane %v711, 4
    %v713 = vadd.f32 %v711, %v712
    %v714 = vrot.slane %v713, 2
    %v715 = vadd.f32 %v713, %v714
    %v716 = vrot.slane %v715, 1
    %v717 = vadd.f32 %v715, %v716
    %v718 = vadd.f32 %v666, %v668
    %v719 = vrot.slane %v718, 4
    %v720 = vadd.f32 %v718, %v719
    %v721 = vrot.slane %v720, 2
    %v722 = vadd.f32 %v720, %v721
    %v723 = vrot.slane %v722, 1
    %v724 = vadd.f32 %v722, %v723
    %v725 = vadd.f32 %v667, %v669
    %v726 = vrot.slane %v725, 4
    %v727 = vadd.f32 %v725, %v726
    %v728 = vrot.slane %v727, 2
    %v729 = vadd.f32 %v727, %v728
    %v730 = vrot.slane %v729, 1
    %v731 = vadd.f32 %v729, %v730
    %v732 = vadd.f32 %v670, %v672
    %v733 = vrot.slane %v732, 4
    %v734 = vadd.f32 %v732, %v733
    %v735 = vrot.slane %v734, 2
    %v736 = vadd.f32 %v734, %v735
    %v737 = vrot.slane %v736, 1
    %v738 = vadd.f32 %v736, %v737
    %v739 = vadd.f32 %v671, %v673
    %v740 = vrot.slane %v739, 4
    %v741 = vadd.f32 %v739, %v740
    %v742 = vrot.slane %v741, 2
    %v743 = vadd.f32 %v741, %v742
    %v744 = vrot.slane %v743, 1
    %v745 = vadd.f32 %v743, %v744
    %v746 = vadd.f32 %v674, %v676
    %v747 = vrot.slane %v746, 4
    %v748 = vadd.f32 %v746, %v747
    %v749 = vrot.slane %v748, 2
    %v750 = vadd.f32 %v748, %v749
    %v751 = vrot.slane %v750, 1
    %v752 = vadd.f32 %v750, %v751
    %v753 = vadd.f32 %v675, %v677
    %v754 = vrot.slane %v753, 4
    %v755 = vadd.f32 %v753, %v754
    %v756 = vrot.slane %v755, 2
    %v757 = vadd.f32 %v755, %v756
    %v758 = vrot.slane %v757, 1
    %v759 = vadd.f32 %v757, %v758
    %v760 = vadd.f32 %v678, %v680
    %v761 = vrot.slane %v760, 4
    %v762 = vadd.f32 %v760, %v761
    %v763 = vrot.slane %v762, 2
    %v764 = vadd.f32 %v762, %v763
    %v765 = vrot.slane %v764, 1
    %v766 = vadd.f32 %v764, %v765
    %v767 = vadd.f32 %v679, %v681
    %v768 = vrot.slane %v767, 4
    %v769 = vadd.f32 %v767, %v768
    %v770 = vrot.slane %v769, 2
    %v771 = vadd.f32 %v769, %v770
    %v772 = vrot.slane %v771, 1
    %v773 = vadd.f32 %v771, %v772
    %v774 = vadd.f32 %v682, %v684
    %v775 = vrot.slane %v774, 4
    %v776 = vadd.f32 %v774, %v775
    %v777 = vrot.slane %v776, 2
    %v778 = vadd.f32 %v776, %v777
    %v779 = vrot.slane %v778, 1
    %v780 = vadd.f32 %v778, %v779
    %v781 = vadd.f32 %v683, %v685
    %v782 = vrot.slane %v781, 4
    %v783 = vadd.f32 %v781, %v782
    %v784 = vrot.slane %v783, 2
    %v785 = vadd.f32 %v783, %v784
    %v786 = vrot.slane %v785, 1
    %v787 = vadd.f32 %v785, %v786
    %v788 = vadd.f32 %v686, %v688
    %v789 = vrot.slane %v788, 4
    %v790 = vadd.f32 %v788, %v789
    %v791 = vrot.slane %v790, 2
    %v792 = vadd.f32 %v790, %v791
    %v793 = vrot.slane %v792, 1
    %v794 = vadd.f32 %v792, %v793
    %v795 = vadd.f32 %v687, %v689
    %v796 = vrot.slane %v795, 4
    %v797 = vadd.f32 %v795, %v796
    %v798 = vrot.slane %v797, 2
    %v799 = vadd.f32 %v797, %v798
    %v800 = vrot.slane %v799, 1
    %v801 = vadd.f32 %v799, %v800
    %v802 = vrcp.pop 16.0
    %v803 = vmul.f32 %v696, %v802
    %v804 = vmul.f32 %v703, %v802
    %v805 = vmul.f32 %v710, %v802
    %v806 = vmul.f32 %v717, %v802
    %v807 = vmul.f32 %v724, %v802
    %v808 = vmul.f32 %v731, %v802
    %v809 = vmul.f32 %v738, %v802
    %v810 = vmul.f32 %v745, %v802
    %v811 = vmul.f32 %v752, %v802
    %v812 = vmul.f32 %v759, %v802
    %v813 = vmul.f32 %v766, %v802
    %v814 = vmul.f32 %v773, %v802
    %v815 = vmul.f32 %v780, %v802
    %v816 = vmul.f32 %v787, %v802
    %v817 = vmul.f32 %v794, %v802
    %v818 = vmul.f32 %v801, %v802
    %v819 = vmax.f32 %v658, %v660
    %v820 = vrot.slane %v819, 4
    %v821 = vmax.f32 %v819, %v820
    %v822 = vrot.slane %v821, 2
    %v823 = vmax.f32 %v821, %v822
    %v824 = vrot.slane %v823, 1
    %v825 = vmax.f32 %v823, %v824
    %v826 = vmax.f32 %v659, %v661
    %v827 = vrot.slane %v826, 4
    %v828 = vmax.f32 %v826, %v827
    %v829 = vrot.slane %v828, 2
    %v830 = vmax.f32 %v828, %v829
    %v831 = vrot.slane %v830, 1
    %v832 = vmax.f32 %v830, %v831
    %v833 = vmax.f32 %v662, %v664
    %v834 = vrot.slane %v833, 4
    %v835 = vmax.f32 %v833, %v834
    %v836 = vrot.slane %v835, 2
    %v837 = vmax.f32 %v835, %v836
    %v838 = vrot.slane %v837, 1
    %v839 = vmax.f32 %v837, %v838
    %v840 = vmax.f32 %v663, %v665
    %v841 = vrot.slane %v840, 4
    %v842 = vmax.f32 %v840, %v841
    %v843 = vrot.slane %v842, 2
    %v844 = vmax.f32 %v842, %v843
    %v845 = vrot.slane %v844, 1
    %v846 = vmax.f32 %v844, %v845
    %v847 = vmax.f32 %v666, %v668
    %v848 = vrot.slane %v847, 4
    %v849 = vmax.f32 %v847, %v848
    %v850 = vrot.slane %v849, 2
    %v851 = vmax.f32 %v849, %v850
    %v852 = vrot.slane %v851, 1
    %v853 = vmax.f32 %v851, %v852
    %v854 = vmax.f32 %v667, %v669
    %v855 = vrot.slane %v854, 4
    %v856 = vmax.f32 %v854, %v855
    %v857 = vrot.slane %v856, 2
    %v858 = vmax.f32 %v856, %v857
    %v859 = vrot.slane %v858, 1
    %v860 = vmax.f32 %v858, %v859
    %v861 = vmax.f32 %v670, %v672
    %v862 = vrot.slane %v861, 4
    %v863 = vmax.f32 %v861, %v862
    %v864 = vrot.slane %v863, 2
    %v865 = vmax.f32 %v863, %v864
    %v866 = vrot.slane %v865, 1
    %v867 = vmax.f32 %v865, %v866
    %v868 = vmax.f32 %v671, %v673
    %v869 = vrot.slane %v868, 4
    %v870 = vmax.f32 %v868, %v869
    %v871 = vrot.slane %v870, 2
    %v872 = vmax.f32 %v870, %v871
    %v873 = vrot.slane %v872, 1
    %v874 = vmax.f32 %v872, %v873
    %v875 = vmax.f32 %v674, %v676
    %v876 = vrot.slane %v875, 4
    %v877 = vmax.f32 %v875, %v876
    %v878 = vrot.slane %v877, 2
    %v879 = vmax.f32 %v877, %v878
    %v880 = vrot.slane %v879, 1
    %v881 = vmax.f32 %v879, %v880
    %v882 = vmax.f32 %v675, %v677
    %v883 = vrot.slane %v882, 4
    %v884 = vmax.f32 %v882, %v883
    %v885 = vrot.slane %v884, 2
    %v886 = vmax.f32 %v884, %v885
    %v887 = vrot.slane %v886, 1
    %v888 = vmax.f32 %v886, %v887
    %v889 = vmax.f32 %v678, %v680
    %v890 = vrot.slane %v889, 4
    %v891 = vmax.f32 %v889, %v890
    %v892 = vrot.slane %v891, 2
    %v893 = vmax.f32 %v891, %v892
    %v894 = vrot.slane %v893, 1
    %v895 = vmax.f32 %v893, %v894
    %v896 = vmax.f32 %v679, %v681
    %v897 = vrot.slane %v896, 4
    %v898 = vmax.f32 %v896, %v897
    %v899 = vrot.slane %v898, 2
    %v900 = vmax.f32 %v898, %v899
    %v901 = vrot.slane %v900, 1
    %v902 = vmax.f32 %v900, %v901
    %v903 = vmax.f32 %v682, %v684
    %v904 = vrot.slane %v903, 4
    %v905 = vmax.f32 %v903, %v904
    %v906 = vrot.slane %v905, 2
    %v907 = vmax.f32 %v905, %v906
    %v908 = vrot.slane %v907, 1
    %v909 = vmax.f32 %v907, %v908
    %v910 = vmax.f32 %v683, %v685
    %v911 = vrot.slane %v910, 4
    %v912 = vmax.f32 %v910, %v911
    %v913 = vrot.slane %v912, 2
    %v914 = vmax.f32 %v912, %v913
    %v915 = vrot.slane %v914, 1
    %v916 = vmax.f32 %v914, %v915
    %v917 = vmax.f32 %v686, %v688
    %v918 = vrot.slane %v917, 4
    %v919 = vmax.f32 %v917, %v918
    %v920 = vrot.slane %v919, 2
    %v921 = vmax.f32 %v919, %v920
    %v922 = vrot.slane %v921, 1
    %v923 = vmax.f32 %v921, %v922
    %v924 = vmax.f32 %v687, %v689
    %v925 = vrot.slane %v924, 4
    %v926 = vmax.f32 %v924, %v925
    %v927 = vrot.slane %v926, 2
    %v928 = vmax.f32 %v926, %v927
    %v929 = vrot.slane %v928, 1
    %v930 = vmax.f32 %v928, %v929
    %v947 = vsel %vm283, %v805, %v803
    %v948 = vsel %vm285, %v807, %v947
    %v949 = vsel %vm287, %v809, %v948
    %v950 = vsel %vm289, %v811, %v949
    %v951 = vsel %vm291, %v813, %v950
    %v952 = vsel %vm293, %v815, %v951
    %v953 = vsel %vm295, %v817, %v952
    %v954 = vsel %vm283, %v806, %v804
    %v955 = vsel %vm285, %v808, %v954
    %v956 = vsel %vm287, %v810, %v955
    %v957 = vsel %vm289, %v812, %v956
    %v958 = vsel %vm291, %v814, %v957
    %v959 = vsel %vm293, %v816, %v958
    %v960 = vsel %vm295, %v818, %v959
    %v979 = vsel %vm283, %v839, %v825
    %v980 = vsel %vm285, %v853, %v979
    %v981 = vsel %vm287, %v867, %v980
    %v982 = vsel %vm289, %v881, %v981
    %v983 = vsel %vm291, %v895, %v982
    %v984 = vsel %vm293, %v909, %v983
    %v985 = vsel %vm295, %v923, %v984
    %v986 = vsel %vm283, %v846, %v832
    %v987 = vsel %vm285, %v860, %v986
    %v988 = vsel %vm287, %v874, %v987
    %v989 = vsel %vm289, %v888, %v988
    %v990 = vsel %vm291, %v902, %v989
    %v991 = vsel %vm293, %v916, %v990
    %v992 = vsel %vm295, %v930, %v991
    %v995 = vld [vmem:[#allocation5] sm:$0xff]
    %v996 = vld [vmem:[#allocation5 + $0x8] sm:$0xff]
    %v997 = vld [vmem:[#allocation5 + $0x10] sm:$0xff]
    %v998 = vld [vmem:[#allocation5 + $0x18] sm:$0xff]
    %v999 = vld [vmem:[#allocation5 + $0x20] sm:$0xff]
    %v1000 = vld [vmem:[#allocation5 + $0x28] sm:$0xff]
    %v1001 = vld [vmem:[#allocation5 + $0x30] sm:$0xff]
    %v1002 = vld [vmem:[#allocation5 + $0x38] sm:$0xff]
    %v1003 = vld [vmem:[#allocation5 + $0x40] sm:$0xff]
    %v1004 = vld [vmem:[#allocation5 + $0x48] sm:$0xff]
    %v1005 = vld [vmem:[#allocation5 + $0x50] sm:$0xff]
    %v1006 = vld [vmem:[#allocation5 + $0x58] sm:$0xff]
    %v1007 = vld [vmem:[#allocation5 + $0x60] sm:$0xff]
    %v1008 = vld [vmem:[#allocation5 + $0x68] sm:$0xff]
    %v1009 = vld [vmem:[#allocation5 + $0x70] sm:$0xff]
    %v1010 = vld [vmem:[#allocation5 + $0x78] sm:$0xff]
    %v1011 = vld [vmem:[#allocation5 + $0x80] sm:$0xff]
    %v1012 = vld [vmem:[#allocation5 + $0x88] sm:$0xff]
    %v1013 = vld [vmem:[#allocation5 + $0x90] sm:$0xff]
    %v1014 = vld [vmem:[#allocation5 + $0x98] sm:$0xff]
    %v1015 = vld [vmem:[#allocation5 + $0xa0] sm:$0xff]
    %v1016 = vld [vmem:[#allocation5 + $0xa8] sm:$0xff]
    %v1017 = vld [vmem:[#allocation5 + $0xb0] sm:$0xff]
    %v1018 = vld [vmem:[#allocation5 + $0xb8] sm:$0xff]
    %v1019 = vld [vmem:[#allocation5 + $0xc0] sm:$0xff]
    %v1020 = vld [vmem:[#allocation5 + $0xc8] sm:$0xff]
    %v1021 = vld [vmem:[#allocation5 + $0xd0] sm:$0xff]
    %v1022 = vld [vmem:[#allocation5 + $0xd8] sm:$0xff]
    %v1023 = vld [vmem:[#allocation5 + $0xe0] sm:$0xff]
    %v1024 = vld [vmem:[#allocation5 + $0xe8] sm:$0xff]
    %v1025 = vld [vmem:[#allocation5 + $0xf0] sm:$0xff]
    %v1026 = vld [vmem:[#allocation5 + $0xf8] sm:$0xff]
    %v1027 = vld [vmem:[#allocation5 + $0x100] sm:$0xff]
    %v1028 = vld [vmem:[#allocation5 + $0x108] sm:$0xff]
    %v1029 = vld [vmem:[#allocation5 + $0x110] sm:$0xff]
    %v1030 = vld [vmem:[#allocation5 + $0x118] sm:$0xff]
    %v1031 = vld [vmem:[#allocation5 + $0x120] sm:$0xff]
    %v1032 = vld [vmem:[#allocation5 + $0x128] sm:$0xff]
    %v1033 = vld [vmem:[#allocation5 + $0x130] sm:$0xff]
    %v1034 = vld [vmem:[#allocation5 + $0x138] sm:$0xff]
    %v1035 = vld [vmem:[#allocation5 + $0x140] sm:$0xff]
    %v1036 = vld [vmem:[#allocation5 + $0x148] sm:$0xff]
    %v1037 = vld [vmem:[#allocation5 + $0x150] sm:$0xff]
    %v1038 = vld [vmem:[#allocation5 + $0x158] sm:$0xff]
    %v1039 = vld [vmem:[#allocation5 + $0x160] sm:$0xff]
    %v1040 = vld [vmem:[#allocation5 + $0x168] sm:$0xff]
    %v1041 = vld [vmem:[#allocation5 + $0x170] sm:$0xff]
    %v1042 = vld [vmem:[#allocation5 + $0x178] sm:$0xff]
    %v1043 = vld [vmem:[#allocation5 + $0x180] sm:$0xff]
    %v1044 = vld [vmem:[#allocation5 + $0x188] sm:$0xff]
    %v1045 = vld [vmem:[#allocation5 + $0x190] sm:$0xff]
    %v1046 = vld [vmem:[#allocation5 + $0x198] sm:$0xff]
    %v1047 = vld [vmem:[#allocation5 + $0x1a0] sm:$0xff]
    %v1048 = vld [vmem:[#allocation5 + $0x1a8] sm:$0xff]
    %v1049 = vld [vmem:[#allocation5 + $0x1b0] sm:$0xff]
    %v1050 = vld [vmem:[#allocation5 + $0x1b8] sm:$0xff]
    %v1051 = vld [vmem:[#allocation5 + $0x1c0] sm:$0xff]
    %v1052 = vld [vmem:[#allocation5 + $0x1c8] sm:$0xff]
    %v1053 = vld [vmem:[#allocation5 + $0x1d0] sm:$0xff]
    %v1054 = vld [vmem:[#allocation5 + $0x1d8] sm:$0xff]
    %v1055 = vld [vmem:[#allocation5 + $0x1e0] sm:$0xff]
    %v1056 = vld [vmem:[#allocation5 + $0x1e8] sm:$0xff]
    %v1057 = vld [vmem:[#allocation5 + $0x1f0] sm:$0xff]
    %v1058 = vld [vmem:[#allocation5 + $0x1f8] sm:$0xff]
    %v1059 = vld [vmem:[#allocation5 + $0x200] sm:$0xff]
    %v1060 = vld [vmem:[#allocation5 + $0x208] sm:$0xff]
    %v1061 = vld [vmem:[#allocation5 + $0x210] sm:$0xff]
    %v1062 = vld [vmem:[#allocation5 + $0x218] sm:$0xff]
    %v1063 = vld [vmem:[#allocation5 + $0x220] sm:$0xff]
    %v1064 = vld [vmem:[#allocation5 + $0x228] sm:$0xff]
    %v1065 = vld [vmem:[#allocation5 + $0x230] sm:$0xff]
    %v1066 = vld [vmem:[#allocation5 + $0x238] sm:$0xff]
    %v1067 = vld [vmem:[#allocation5 + $0x240] sm:$0xff]
    %v1068 = vld [vmem:[#allocation5 + $0x248] sm:$0xff]
    %v1069 = vld [vmem:[#allocation5 + $0x250] sm:$0xff]
    %v1070 = vld [vmem:[#allocation5 + $0x258] sm:$0xff]
    %v1071 = vld [vmem:[#allocation5 + $0x260] sm:$0xff]
    %v1072 = vld [vmem:[#allocation5 + $0x268] sm:$0xff]
    %v1073 = vld [vmem:[#allocation5 + $0x270] sm:$0xff]
    %v1074 = vld [vmem:[#allocation5 + $0x278] sm:$0xff]
    %v1075 = vld [vmem:[#allocation5 + $0x280] sm:$0xff]
    %v1076 = vld [vmem:[#allocation5 + $0x288] sm:$0xff]
    %v1077 = vld [vmem:[#allocation5 + $0x290] sm:$0xff]
    %v1078 = vld [vmem:[#allocation5 + $0x298] sm:$0xff]
    %v1079 = vld [vmem:[#allocation5 + $0x2a0] sm:$0xff]
    %v1080 = vld [vmem:[#allocation5 + $0x2a8] sm:$0xff]
    %v1081 = vld [vmem:[#allocation5 + $0x2b0] sm:$0xff]
    %v1082 = vld [vmem:[#allocation5 + $0x2b8] sm:$0xff]
    %v1083 = vld [vmem:[#allocation5 + $0x2c0] sm:$0xff]
    %v1084 = vld [vmem:[#allocation5 + $0x2c8] sm:$0xff]
    %v1085 = vld [vmem:[#allocation5 + $0x2d0] sm:$0xff]
    %v1086 = vld [vmem:[#allocation5 + $0x2d8] sm:$0xff]
    %v1087 = vld [vmem:[#allocation5 + $0x2e0] sm:$0xff]
    %v1088 = vld [vmem:[#allocation5 + $0x2e8] sm:$0xff]
    %v1089 = vld [vmem:[#allocation5 + $0x2f0] sm:$0xff]
    %v1090 = vld [vmem:[#allocation5 + $0x2f8] sm:$0xff]
    %v1091 = vld [vmem:[#allocation5 + $0x300] sm:$0xff]
    %v1092 = vld [vmem:[#allocation5 + $0x308] sm:$0xff]
    %v1093 = vld [vmem:[#allocation5 + $0x310] sm:$0xff]
    %v1094 = vld [vmem:[#allocation5 + $0x318] sm:$0xff]
    %v1095 = vld [vmem:[#allocation5 + $0x320] sm:$0xff]
    %v1096 = vld [vmem:[#allocation5 + $0x328] sm:$0xff]
    %v1097 = vld [vmem:[#allocation5 + $0x330] sm:$0xff]
    %v1098 = vld [vmem:[#allocation5 + $0x338] sm:$0xff]
    %v1099 = vld [vmem:[#allocation5 + $0x340] sm:$0xff]
    %v1100 = vld [vmem:[#allocation5 + $0x348] sm:$0xff]
    %v1101 = vld [vmem:[#allocation5 + $0x350] sm:$0xff]
    %v1102 = vld [vmem:[#allocation5 + $0x358] sm:$0xff]
    %v1103 = vld [vmem:[#allocation5 + $0x360] sm:$0xff]
    %v1104 = vld [vmem:[#allocation5 + $0x368] sm:$0xff]
    %v1105 = vld [vmem:[#allocation5 + $0x370] sm:$0xff]
    %v1106 = vld [vmem:[#allocation5 + $0x378] sm:$0xff]
    %v1107 = vld [vmem:[#allocation5 + $0x380] sm:$0xff]
    %v1108 = vld [vmem:[#allocation5 + $0x388] sm:$0xff]
    %v1109 = vld [vmem:[#allocation5 + $0x390] sm:$0xff]
    %v1110 = vld [vmem:[#allocation5 + $0x398] sm:$0xff]
    %v1111 = vld [vmem:[#allocation5 + $0x3a0] sm:$0xff]
    %v1112 = vld [vmem:[#allocation5 + $0x3a8] sm:$0xff]
    %v1113 = vld [vmem:[#allocation5 + $0x3b0] sm:$0xff]
    %v1114 = vld [vmem:[#allocation5 + $0x3b8] sm:$0xff]
    %v1115 = vld [vmem:[#allocation5 + $0x3c0] sm:$0xff]
    %v1116 = vld [vmem:[#allocation5 + $0x3c8] sm:$0xff]
    %v1117 = vld [vmem:[#allocation5 + $0x3d0] sm:$0xff]
    %v1118 = vld [vmem:[#allocation5 + $0x3d8] sm:$0xff]
    %v1119 = vld [vmem:[#allocation5 + $0x3e0] sm:$0xff]
    %v1120 = vld [vmem:[#allocation5 + $0x3e8] sm:$0xff]
    %v1121 = vld [vmem:[#allocation5 + $0x3f0] sm:$0xff]
    %v1122 = vld [vmem:[#allocation5 + $0x3f8] sm:$0xff]
    %1123 = vmatprep.subr.mxu0 %v1026
    %1124 = vmatpush1.msra.mxu0 %v1025
    %1125 = vmatprep.subr.mxu0 %v1024
    %1126 = vmatpush1.msra.mxu0 %v1023
    %1127 = vmatprep.subr.mxu0 %v1022
    %1128 = vmatpush1.msra.mxu0 %v1021
    %1129 = vmatprep.subr.mxu0 %v1020
    %1130 = vmatpush1.msra.mxu0 %v1019
    %1131 = vmatprep.subr.mxu0 %v1018
    %1132 = vmatpush1.msra.mxu0 %v1017
    %1133 = vmatprep.subr.mxu0 %v1016
    %1134 = vmatpush1.msra.mxu0 %v1015
    %1135 = vmatprep.subr.mxu0 %v1014
    %1136 = vmatpush1.msra.mxu0 %v1013
    %1137 = vmatprep.subr.mxu0 %v1012
    %1138 = vmatpush1.msra.mxu0 %v1011
    %1139 = vmatprep.subr.mxu0 %v1010
    %1140 = vmatpush1.msra.mxu0 %v1009
    %1141 = vmatprep.subr.mxu0 %v1008
    %1142 = vmatpush1.msra.mxu0 %v1007
    %1143 = vmatprep.subr.mxu0 %v1006
    %1144 = vmatpush1.msra.mxu0 %v1005
    %1145 = vmatprep.subr.mxu0 %v1004
    %1146 = vmatpush1.msra.mxu0 %v1003
    %1147 = vmatprep.subr.mxu0 %v1002
    %1148 = vmatpush1.msra.mxu0 %v1001
    %1149 = vmatprep.subr.mxu0 %v1000
    %1150 = vmatpush1.msra.mxu0 %v999
    %1151 = vmatprep.subr.mxu0 %v998
    %1152 = vmatpush1.msra.mxu0 %v997
    %1153 = vmatprep.subr.mxu0 %v996
    %1154 = vmatpush1.msra.mxu0 %v995
    %1155 = vmatprep.subr.mxu0 %v1058
    %1156 = vmatpush2.msra.mxu0 %v1057
    %1157 = vmatprep.subr.mxu0 %v1056
    %1158 = vmatpush2.msra.mxu0 %v1055
    %1159 = vmatprep.subr.mxu0 %v1054
    %1160 = vmatpush2.msra.mxu0 %v1053
    %1161 = vmatprep.subr.mxu0 %v1052
    %1162 = vmatpush2.msra.mxu0 %v1051
    %1163 = vmatprep.subr.mxu0 %v1050
    %1164 = vmatpush2.msra.mxu0 %v1049
    %1165 = vmatprep.subr.mxu0 %v1048
    %1166 = vmatpush2.msra.mxu0 %v1047
    %1167 = vmatprep.subr.mxu0 %v1046
    %1168 = vmatpush2.msra.mxu0 %v1045
    %1169 = vmatprep.subr.mxu0 %v1044
    %1170 = vmatpush2.msra.mxu0 %v1043
    %1171 = vmatprep.subr.mxu0 %v1042
    %1172 = vmatpush2.msra.mxu0 %v1041
    %1173 = vmatprep.subr.mxu0 %v1040
    %1174 = vmatpush2.msra.mxu0 %v1039
    %1175 = vmatprep.subr.mxu0 %v1038
    %1176 = vmatpush2.msra.mxu0 %v1037
    %1177 = vmatprep.subr.mxu0 %v1036
    %1178 = vmatpush2.msra.mxu0 %v1035
    %1179 = vmatprep.subr.mxu0 %v1034
    %1180 = vmatpush2.msra.mxu0 %v1033
    %1181 = vmatprep.subr.mxu0 %v1032
    %1182 = vmatpush2.msra.mxu0 %v1031
    %1183 = vmatprep.subr.mxu0 %v1030
    %1184 = vmatpush2.msra.mxu0 %v1029
    %1185 = vmatprep.subr.mxu0 %v1028
    %1186 = vmatpush2.msra.mxu0 %v1027
    %1187 = vmatprep.mubr.f32.mxu0 %v960
    %1188 = vmatmul.mubr.f32.gmra.mxu0 %v953
    %v1189 = vpop.f32.mrf.mxu0
    %v1190 = vadd.f32 0.0, %v1189
    %v1191 = vpop.f32.mrf.mxu0
    %v1192 = vadd.f32 0.0, %v1191
    %1193 = vdwg.mxu0
    %1194 = vmatprep.subr.mxu0 %v1090
    %1195 = vmatpush1.msra.mxu0 %v1089
    %1196 = vmatprep.subr.mxu0 %v1088
    %1197 = vmatpush1.msra.mxu0 %v1087
    %1198 = vmatprep.subr.mxu0 %v1086
    %1199 = vmatpush1.msra.mxu0 %v1085
    %1200 = vmatprep.subr.mxu0 %v1084
    %1201 = vmatpush1.msra.mxu0 %v1083
    %1202 = vmatprep.subr.mxu0 %v1082
    %1203 = vmatpush1.msra.mxu0 %v1081
    %1204 = vmatprep.subr.mxu0 %v1080
    %1205 = vmatpush1.msra.mxu0 %v1079
    %1206 = vmatprep.subr.mxu0 %v1078
    %1207 = vmatpush1.msra.mxu0 %v1077
    %1208 = vmatprep.subr.mxu0 %v1076
    %1209 = vmatpush1.msra.mxu0 %v1075
    %1210 = vmatprep.subr.mxu0 %v1074
    %1211 = vmatpush1.msra.mxu0 %v1073
    %1212 = vmatprep.subr.mxu0 %v1072
    %1213 = vmatpush1.msra.mxu0 %v1071
    %1214 = vmatprep.subr.mxu0 %v1070
    %1215 = vmatpush1.msra.mxu0 %v1069
    %1216 = vmatprep.subr.mxu0 %v1068
    %1217 = vmatpush1.msra.mxu0 %v1067
    %1218 = vmatprep.subr.mxu0 %v1066
    %1219 = vmatpush1.msra.mxu0 %v1065
    %1220 = vmatprep.subr.mxu0 %v1064
    %1221 = vmatpush1.msra.mxu0 %v1063
    %1222 = vmatprep.subr.mxu0 %v1062
    %1223 = vmatpush1.msra.mxu0 %v1061
    %1224 = vmatprep.subr.mxu0 %v1060
    %1225 = vmatpush1.msra.mxu0 %v1059
    %1226 = vmatprep.subr.mxu0 %v1122
    %1227 = vmatpush2.msra.mxu0 %v1121
    %1228 = vmatprep.subr.mxu0 %v1120
    %1229 = vmatpush2.msra.mxu0 %v1119
    %1230 = vmatprep.subr.mxu0 %v1118
    %1231 = vmatpush2.msra.mxu0 %v1117
    %1232 = vmatprep.subr.mxu0 %v1116
    %1233 = vmatpush2.msra.mxu0 %v1115
    %1234 = vmatprep.subr.mxu0 %v1114
    %1235 = vmatpush2.msra.mxu0 %v1113
    %1236 = vmatprep.subr.mxu0 %v1112
    %1237 = vmatpush2.msra.mxu0 %v1111
    %1238 = vmatprep.subr.mxu0 %v1110
    %1239 = vmatpush2.msra.mxu0 %v1109
    %1240 = vmatprep.subr.mxu0 %v1108
    %1241 = vmatpush2.msra.mxu0 %v1107
    %1242 = vmatprep.subr.mxu0 %v1106
    %1243 = vmatpush2.msra.mxu0 %v1105
    %1244 = vmatprep.subr.mxu0 %v1104
    %1245 = vmatpush2.msra.mxu0 %v1103
    %1246 = vmatprep.subr.mxu0 %v1102
    %1247 = vmatpush2.msra.mxu0 %v1101
    %1248 = vmatprep.subr.mxu0 %v1100
    %1249 = vmatpush2.msra.mxu0 %v1099
    %1250 = vmatprep.subr.mxu0 %v1098
    %1251 = vmatpush2.msra.mxu0 %v1097
    %1252 = vmatprep.subr.mxu0 %v1096
    %1253 = vmatpush2.msra.mxu0 %v1095
    %1254 = vmatprep.subr.mxu0 %v1094
    %1255 = vmatpush2.msra.mxu0 %v1093
    %1256 = vmatprep.subr.mxu0 %v1092
    %1257 = vmatpush2.msra.mxu0 %v1091
    %1258 = vmatprep.mubr.f32.mxu0 %v992
    %1259 = vmatmul.mubr.f32.gmra.mxu0 %v985
    %v1260 = vpop.f32.mrf.mxu0
    %v1261 = vadd.f32 %v1190, %v1260
    %v1262 = vpop.f32.mrf.mxu0
    %v1263 = vadd.f32 %v1192, %v1262
    %1264 = vdwg.mxu0
    %v1265 = vsub.f32 0.0, %v1261
    %v1266 = vsub.f32 0.0, %v1263
    %v1267 = vmul.f32 %v1265, 1.442695
    %v1268 = vpow.pop %v1267
    %v1269 = vmul.f32 %v1266, 1.442695
    %v1270 = vpow.pop %v1269
    %v1271 = vadd.f32 %v1268, 1.0
    %v1272 = vadd.f32 %v1270, 1.0
    %v1273 = vrcp.pop %v1271
    %v1274 = vmul.f32 1.0, %v1273
    %v1275 = vrcp.pop %v1272
    %v1276 = vmul.f32 1.0, %v1275
    %v1279 = vcombine.low %v1274, %v1276
    %v1280 = vcombine.high %v1274, %v1276
    %v1282 = vunpack.c.l.s4 1966171168
    %v1283 = vunpack.c.0.s8 %v1282
    %v1284 = vlaneseq
    %v1285 = vshrl.u32 %v1284, 7
    %v1286 = vsub.s32 %v1283, %v1285
    %v1287 = vrot.slane %v1279, %v1286
    %v1289 = vunpack.c.l.s4 1966171168
    %v1290 = vunpack.c.0.s8 %v1289
    %v1291 = vlaneseq
    %v1292 = vshrl.u32 %v1291, 7
    %v1293 = vsub.s32 %v1290, %v1292
    %v1294 = vrot.slane %v1280, %v1293
    %v1295 = vcombine.high %v1287, %v1287
    %v1296 = vcombine.high %v1294, %v1294
    %v1298 = vunpack.c.l.s4 1966171168
    %v1299 = vunpack.c.0.s8 %v1298
    %v1300 = vlaneseq
    %v1301 = vshrl.u32 %v1300, 7
    %v1302 = vsub.s32 %v1299, %v1301
    %v1303 = vrot.slane %v1287, %v1302
    %v1305 = vunpack.c.l.s4 1966171168
    %v1306 = vunpack.c.0.s8 %v1305
    %v1307 = vlaneseq
    %v1308 = vshrl.u32 %v1307, 7
    %v1309 = vsub.s32 %v1306, %v1308
    %v1310 = vrot.slane %v1294, %v1309
    %v1312 = vunpack.c.l.s4 1966171168
    %v1313 = vunpack.c.0.s8 %v1312
    %v1314 = vlaneseq
    %v1315 = vshrl.u32 %v1314, 7
    %v1316 = vsub.s32 %v1313, %v1315
    %v1317 = vrot.slane %v1295, %v1316
    %v1319 = vunpack.c.l.s4 1966171168
    %v1320 = vunpack.c.0.s8 %v1319
    %v1321 = vlaneseq
    %v1322 = vshrl.u32 %v1321, 7
    %v1323 = vsub.s32 %v1320, %v1322
    %v1324 = vrot.slane %v1296, %v1323
    %v1325 = vcombine.high %v1303, %v1303
    %v1326 = vcombine.high %v1310, %v1310
    %v1327 = vcombine.high %v1317, %v1317
    %v1328 = vcombine.high %v1324, %v1324
    %v1329 = vlaneseq
    %v1330 = vshrl.u32 %v1329, 7
    %v1331 = vsub.s32 0, %v1330
    %v1332 = vrot.slane %v1303, %v1331
    %v1333 = vlaneseq
    %v1334 = vshrl.u32 %v1333, 7
    %v1335 = vsub.s32 1, %v1334
    %v1336 = vrot.slane %v1303, %v1335
    %v1337 = vlaneseq
    %v1338 = vshrl.u32 %v1337, 7
    %v1339 = vsub.s32 0, %v1338
    %v1340 = vrot.slane %v1317, %v1339
    %v1341 = vlaneseq
    %v1342 = vshrl.u32 %v1341, 7
    %v1343 = vsub.s32 1, %v1342
    %v1344 = vrot.slane %v1317, %v1343
    %v1345 = vlaneseq
    %v1346 = vshrl.u32 %v1345, 7
    %v1347 = vsub.s32 0, %v1346
    %v1348 = vrot.slane %v1325, %v1347
    %v1349 = vlaneseq
    %v1350 = vshrl.u32 %v1349, 7
    %v1351 = vsub.s32 1, %v1350
    %v1352 = vrot.slane %v1325, %v1351
    %v1353 = vlaneseq
    %v1354 = vshrl.u32 %v1353, 7
    %v1355 = vsub.s32 0, %v1354
    %v1356 = vrot.slane %v1327, %v1355
    %v1357 = vlaneseq
    %v1358 = vshrl.u32 %v1357, 7
    %v1359 = vsub.s32 1, %v1358
    %v1360 = vrot.slane %v1327, %v1359
    %v1361 = vlaneseq
    %v1362 = vshrl.u32 %v1361, 7
    %v1363 = vsub.s32 0, %v1362
    %v1364 = vrot.slane %v1310, %v1363
    %v1365 = vlaneseq
    %v1366 = vshrl.u32 %v1365, 7
    %v1367 = vsub.s32 1, %v1366
    %v1368 = vrot.slane %v1310, %v1367
    %v1369 = vlaneseq
    %v1370 = vshrl.u32 %v1369, 7
    %v1371 = vsub.s32 0, %v1370
    %v1372 = vrot.slane %v1324, %v1371
    %v1373 = vlaneseq
    %v1374 = vshrl.u32 %v1373, 7
    %v1375 = vsub.s32 1, %v1374
    %v1376 = vrot.slane %v1324, %v1375
    %v1377 = vlaneseq
    %v1378 = vshrl.u32 %v1377, 7
    %v1379 = vsub.s32 0, %v1378
    %v1380 = vrot.slane %v1326, %v1379
    %v1381 = vlaneseq
    %v1382 = vshrl.u32 %v1381, 7
    %v1383 = vsub.s32 1, %v1382
    %v1384 = vrot.slane %v1326, %v1383
    %v1385 = vlaneseq
    %v1386 = vshrl.u32 %v1385, 7
    %v1387 = vsub.s32 0, %v1386
    %v1388 = vrot.slane %v1328, %v1387
    %v1389 = vlaneseq
    %v1390 = vshrl.u32 %v1389, 7
    %v1391 = vsub.s32 1, %v1390
    %v1392 = vrot.slane %v1328, %v1391
    %v1409 = vmul.f32 %v658, %v1332
    %v1410 = vmul.f32 %v659, %v1336
    %v1411 = vmul.f32 %v660, %v1332
    %v1412 = vmul.f32 %v661, %v1336
    %v1413 = vmul.f32 %v662, %v1340
    %v1414 = vmul.f32 %v663, %v1344
    %v1415 = vmul.f32 %v664, %v1340
    %v1416 = vmul.f32 %v665, %v1344
    %v1417 = vmul.f32 %v666, %v1348
    %v1418 = vmul.f32 %v667, %v1352
    %v1419 = vmul.f32 %v668, %v1348
    %v1420 = vmul.f32 %v669, %v1352
    %v1421 = vmul.f32 %v670, %v1356
    %v1422 = vmul.f32 %v671, %v1360
    %v1423 = vmul.f32 %v672, %v1356
    %v1424 = vmul.f32 %v673, %v1360
    %v1425 = vmul.f32 %v674, %v1364
    %v1426 = vmul.f32 %v675, %v1368
    %v1427 = vmul.f32 %v676, %v1364
    %v1428 = vmul.f32 %v677, %v1368
    %v1429 = vmul.f32 %v678, %v1372
    %v1430 = vmul.f32 %v679, %v1376
    %v1431 = vmul.f32 %v680, %v1372
    %v1432 = vmul.f32 %v681, %v1376
    %v1433 = vmul.f32 %v682, %v1380
    %v1434 = vmul.f32 %v683, %v1384
    %v1435 = vmul.f32 %v684, %v1380
    %v1436 = vmul.f32 %v685, %v1384
    %v1437 = vmul.f32 %v686, %v1388
    %v1438 = vmul.f32 %v687, %v1392
    %v1439 = vmul.f32 %v688, %v1388
    %v1440 = vmul.f32 %v689, %v1392
    %1441 = vst [vmem:[#allocation7] sm:$0xff] %v1409
    %1442 = vst [vmem:[#allocation7 + $0x8] sm:$0xff] %v1410
    %1443 = vst [vmem:[#allocation7 + $0x10] sm:$0xff] %v1411
    %1444 = vst [vmem:[#allocation7 + $0x18] sm:$0xff] %v1412
    %1445 = vst [vmem:[#allocation7 + $0x20] sm:$0xff] %v1413
    %1446 = vst [vmem:[#allocation7 + $0x28] sm:$0xff] %v1414
    %1447 = vst [vmem:[#allocation7 + $0x30] sm:$0xff] %v1415
    %1448 = vst [vmem:[#allocation7 + $0x38] sm:$0xff] %v1416
    %1449 = vst [vmem:[#allocation7 + $0x40] sm:$0xff] %v1417
    %1450 = vst [vmem:[#allocation7 + $0x48] sm:$0xff] %v1418
    %1451 = vst [vmem:[#allocation7 + $0x50] sm:$0xff] %v1419
    %1452 = vst [vmem:[#allocation7 + $0x58] sm:$0xff] %v1420
    %1453 = vst [vmem:[#allocation7 + $0x60] sm:$0xff] %v1421
    %1454 = vst [vmem:[#allocation7 + $0x68] sm:$0xff] %v1422
    %1455 = vst [vmem:[#allocation7 + $0x70] sm:$0xff] %v1423
    %1456 = vst [vmem:[#allocation7 + $0x78] sm:$0xff] %v1424
    %1457 = vst [vmem:[#allocation7 + $0x80] sm:$0xff] %v1425
    %1458 = vst [vmem:[#allocation7 + $0x88] sm:$0xff] %v1426
    %1459 = vst [vmem:[#allocation7 + $0x90] sm:$0xff] %v1427
    %1460 = vst [vmem:[#allocation7 + $0x98] sm:$0xff] %v1428
    %1461 = vst [vmem:[#allocation7 + $0xa0] sm:$0xff] %v1429
    %1462 = vst [vmem:[#allocation7 + $0xa8] sm:$0xff] %v1430
    %1463 = vst [vmem:[#allocation7 + $0xb0] sm:$0xff] %v1431
    %1464 = vst [vmem:[#allocation7 + $0xb8] sm:$0xff] %v1432
    %1465 = vst [vmem:[#allocation7 + $0xc0] sm:$0xff] %v1433
    %1466 = vst [vmem:[#allocation7 + $0xc8] sm:$0xff] %v1434
    %1467 = vst [vmem:[#allocation7 + $0xd0] sm:$0xff] %v1435
    %1468 = vst [vmem:[#allocation7 + $0xd8] sm:$0xff] %v1436
    %1469 = vst [vmem:[#allocation7 + $0xe0] sm:$0xff] %v1437
    %1470 = vst [vmem:[#allocation7 + $0xe8] sm:$0xff] %v1438
    %1471 = vst [vmem:[#allocation7 + $0xf0] sm:$0xff] %v1439
    %1472 = vst [vmem:[#allocation7 + $0xf8] sm:$0xff] %v1440
    // Predicated region
    $region26: #{tpu_custom_call.1} parent=1 // pred_check
      _
    $region27: #{tpu_custom_call.1} parent=1 // pred_check_branch
      %1474 = sbr.rel (0) target = $region29
    $region28: #{tpu_custom_call.1} parent=1 // pred_region
      %s1476 = ssub.s32 4096, 4096
      %1477 = vsyncadd [#allocation4], %s1476
      %s1478 = sshll.u32 [#allocation7], 4
      %s1479 = int_to_ptr.vmem [resolvable:$true] %s1478
      %1484 = dma.vmem_to_hbm [thread:$0]  %s1479, 4096, %s4, [#allocation4], 256, 256, 16
    $region29: #{tpu_custom_call.1} parent=1 // pred_fallthru
      _
    // Predicated region
    $region30: #{tpu_custom_call.1} parent=1 // pred_check
      _
    $region31: #{tpu_custom_call.1} parent=1 // pred_check_branch
      %1486 = sbr.rel (0) target = $region33
    $region32: #{tpu_custom_call.1} parent=1 // pred_region
      %1487 = dma.done [#allocation4], 4096
    $region33: #{tpu_custom_call.1} parent=1 // pred_fallthru
      _
    %1488 = vsyncpa [#allocation3], 1
    %1489 = vsyncpa [#allocation6], 1
    %1490 = vsyncpa [#allocation4], 1

</llo_original>
